<compile_context>
chip_gen: v7x
topology: tpu7x:2x2x1
jax: 0.10.0
libtpu: 0.0.40
codegen_flags: <defaults>
</compile_context>

<pallas_src>
import math

import jax
import jax.numpy as jnp
from jax.experimental import pallas as pl
from jax.experimental.pallas import tpu as pltpu


def _round_up(x: int, m: int) -> int:
    return (x + m - 1) // m * m


def _hash_mix(k):
    # Multiply-free avalanche mixer (Jenkins-style) on uint32 vectors.
    # Only add/xor/shift -> lowers on both Mosaic (VPU) and interpret mode.
    k = k + (k << 10)
    k = k ^ (k >> 6)
    k = k + (k << 3)
    k = k ^ (k >> 11)
    k = k + (k << 15)
    return k


def _make_mlp_kernel(*, n_mid, dropout_p, train, compute_dtype):
    use_dropout = bool(train) and float(dropout_p) > 0.0
    keep_thresh = int(round(float(dropout_p) * (1 << 24)))
    inv_keep = 1.0 / (1.0 - float(dropout_p)) if use_dropout else 1.0

    def kernel(seed_ref, x_ref, w_in_ref, b_in_ref, *rest):
        if n_mid > 0:
            w_mid_ref, b_mid_ref, w_out_ref, b_out_ref, o_ref = rest
        else:
            w_out_ref, b_out_ref, o_ref = rest

        tile_m = x_ref.shape[0]
        row_off = pl.program_id(0) * tile_m   # global row offset of this tile

        def relu_dropout(y, layer_idx):
            y = jnp.maximum(y, 0.0)
            if not use_dropout:
                return y
            m, n = y.shape
            # distinct stream per (seed, layer, global row, col)
            seed_plus_layer = seed_ref[0] + jnp.int32(layer_idx * 7919 + 1)
            r = (jax.lax.broadcasted_iota(jnp.int32, (m, n), 0)
                 + row_off + seed_plus_layer).astype(jnp.uint32)
            c = jax.lax.broadcasted_iota(jnp.int32, (m, n), 1).astype(jnp.uint32)
            k = _hash_mix(r)
            k = _hash_mix(k ^ c)
            bits = ((k >> 7) & jnp.uint32(0xFFFFFF)).astype(jnp.int32)
            keep = bits >= jnp.int32(keep_thresh)      # pure integer compare
            return jnp.where(keep, y * jnp.float32(inv_keep), jnp.float32(0.0))

        # ---- input layer: x @ W_in + b_in, ReLU, dropout ----
        h = x_ref[...]                                 # compute_dtype (bf16)
        y = jnp.dot(h, w_in_ref[...], preferred_element_type=jnp.float32)
        y = y + b_in_ref[...]
        y = relu_dropout(y, 0)
        h = y.astype(compute_dtype)

        # ---- mid layers (statically unrolled; activations stay in vregs/VMEM) ----
        for l in range(n_mid):
            y = jnp.dot(h, w_mid_ref[l], preferred_element_type=jnp.float32)
            y = y + b_mid_ref[l]
            y = relu_dropout(y, 1 + l)
            h = y.astype(compute_dtype)

        # ---- output layer: no activation / dropout ----
        y = jnp.dot(h, w_out_ref[...], preferred_element_type=jnp.float32)
        y = y + b_out_ref[...]
        o_ref[...] = y.astype(o_ref.dtype)

    return kernel


def init_mlp_params(key, input_size, output_size, mid_size=None, num_mid_layer=1):
    """Torch-layout params mirroring nn.Linear.reset_parameters: U(-1/sqrt(fan_in), +)."""
    assert num_mid_layer >= 1
    if mid_size is None:
        mid_size = input_size

    def linear_init(k, fan_in, fan_out):
        kw, kb = jax.random.split(k)
        bound = 1.0 / math.sqrt(float(fan_in))
        w = jax.random.uniform(kw, (fan_out, fan_in), jnp.float32, -bound, bound)
        b = jax.random.uniform(kb, (fan_out,), jnp.float32, -bound, bound)
        return {"w": w, "b": b}

    keys = jax.random.split(key, 2 + (num_mid_layer - 1))
    return {
        "input_fc": linear_init(keys[0], input_size, mid_size),
        "mid_fcs": [linear_init(keys[2 + i], mid_size, mid_size)
                    for i in range(num_mid_layer - 1)],
        "out_fc": linear_init(keys[1], mid_size, output_size),
    }


def prepare_mlp_params(params, compute_dtype=jnp.bfloat16):
    """One-time layout prep: transpose weights to [in, out], pad feature dims to
    multiples of 128 (lane-dense), cast matmul operands to compute_dtype, keep
    biases in f32. The per-call forward then has zero layout ops."""
    w_in = params["input_fc"]["w"]      # [mid, in]
    w_out = params["out_fc"]["w"]       # [out, mid]
    in_f = w_in.shape[1]
    mid_f = w_in.shape[0]
    out_f = w_out.shape[0]
    in_p = _round_up(in_f, 128)
    mid_p = _round_up(mid_f, 128)
    out_p = _round_up(out_f, 128)

    def pack_w(w, k_pad, n_pad):
        wt = jnp.transpose(w).astype(compute_dtype)       # [in, out]
        return jnp.pad(wt, ((0, k_pad - wt.shape[0]), (0, n_pad - wt.shape[1])))

    def pack_b(b, n_pad):
        return jnp.pad(b.astype(jnp.float32), (0, n_pad - b.shape[0])).reshape(1, n_pad)

    prepared = {
        "compute_dtype": compute_dtype,
        "in_features": in_f,
        "out_features": out_f,
        "n_mid": len(params["mid_fcs"]),
        "w_in": pack_w(w_in, in_p, mid_p),
        "b_in": pack_b(params["input_fc"]["b"], mid_p),
        "w_out": pack_w(w_out, mid_p, out_p),
        "b_out": pack_b(params["out_fc"]["b"], out_p),
    }
    if prepared["n_mid"] > 0:
        prepared["w_mid"] = jnp.stack(
            [pack_w(m["w"], mid_p, mid_p) for m in params["mid_fcs"]])
        prepared["b_mid"] = jnp.stack(
            [pack_b(m["b"], mid_p) for m in params["mid_fcs"]])
    return prepared


def mlp_forward(prepared, x, *, dropout_p=0.1, train=False, seed=0):
    """Forward pass matching MLP.forward (dropout active only when train=True)."""
    compute_dtype = prepared["compute_dtype"]
    in_f = prepared["in_features"]
    out_f = prepared["out_features"]
    n_mid = prepared["n_mid"]
    assert x.shape[-1] == in_f

    orig_shape = x.shape
    rows = int(math.prod(orig_shape[:-1]))
    x2d = x.reshape(rows, in_f).astype(compute_dtype)

    in_p = prepared["w_in"].shape[0]
    mid_p = prepared["w_in"].shape[1]
    out_p = prepared["w_out"].shape[1]

    # Row tiling: as big as reasonable (<=512) so the pipeline is efficient;
    # tiny inputs just get rounded up to a multiple of 8.
    tile_m = min(512, _round_up(rows, 8))
    grid_m = pl.cdiv(rows, tile_m)
    rows_p = grid_m * tile_m
    x_pad = jnp.pad(x2d, ((0, rows_p - rows), (0, in_p - in_f)))

    seed_arr = jnp.asarray([seed], dtype=jnp.int32)

    # Weights/biases use constant index_maps -> fetched once, resident in VMEM.
    # (All tiles here are far below the 32 MiB scoped / 64 MiB v7x VMEM budget.)
    in_specs = [
        pl.BlockSpec((tile_m, in_p), lambda i, *_: (i, 0)),       # x tile
        pl.BlockSpec((in_p, mid_p), lambda i, *_: (0, 0)),        # W_in
        pl.BlockSpec((1, mid_p), lambda i, *_: (0, 0)),           # b_in
    ]
    args = [x_pad, prepared["w_in"], prepared["b_in"]]
    if n_mid > 0:
        in_specs += [
            pl.BlockSpec((n_mid, mid_p, mid_p), lambda i, *_: (0, 0, 0)),  # W_mid
            pl.BlockSpec((n_mid, 1, mid_p), lambda i, *_: (0, 0, 0)),      # b_mid
        ]
        args += [prepared["w_mid"], prepared["b_mid"]]
    in_specs += [
        pl.BlockSpec((mid_p, out_p), lambda i, *_: (0, 0)),       # W_out
        pl.BlockSpec((1, out_p), lambda i, *_: (0, 0)),           # b_out
    ]
    args += [prepared["w_out"], prepared["b_out"]]

    kernel = _make_mlp_kernel(n_mid=n_mid, dropout_p=dropout_p,
                              train=train, compute_dtype=compute_dtype)

    out_padded = pl.pallas_call(
        kernel,
        out_shape=jax.ShapeDtypeStruct((rows_p, out_p), jnp.float32),
        grid_spec=pltpu.PrefetchScalarGridSpec(
            num_scalar_prefetch=1,          # seed lives in SMEM
            grid=(grid_m,),
            in_specs=in_specs,
            out_specs=pl.BlockSpec((tile_m, out_p), lambda i, *_: (i, 0)),
        ),
        compiler_params=pltpu.CompilerParams(
            dimension_semantics=("parallel",)),
    )(seed_arr, *args)

    out = out_padded[:rows, :out_f]
    return out.reshape(orig_shape[:-1] + (out_f,))


def ref_forward(params, x, compute_dtype=jnp.bfloat16):
    """Pure-JAX reference (eval mode) with the same bf16-operand / f32-accum numerics."""
    def lin(h, layer):
        return (jnp.dot(h.astype(compute_dtype),
                        jnp.transpose(layer["w"]).astype(compute_dtype),
                        preferred_element_type=jnp.float32)
                + layer["b"])
    h = jax.nn.relu(lin(x, params["input_fc"]))
    for mid in params["mid_fcs"]:
        h = jax.nn.relu(lin(h, mid))
    return lin(h, params["out_fc"])


if __name__ == "__main__":
    key = jax.random.PRNGKey(0)
    k_param, k_param2, k_x = jax.random.split(key, 3)

    batch, seq = 2, 8
    input_size, mid_size, output_size = 32, 32, 16

    x = jax.random.normal(k_x, (batch, seq, input_size), dtype=jnp.float32)

    # num_mid_layer = 2 (one hidden mid layer)
    params = init_mlp_params(k_param, input_size, output_size,
                             mid_size=mid_size, num_mid_layer=2)
    prepared = prepare_mlp_params(params)
    y = mlp_forward(prepared, x, dropout_p=0.1, train=False, seed=0)
    jax.block_until_ready(y)
    assert y.shape == (batch, seq, output_size)
    y_ref = ref_forward(params, x)
    assert jnp.allclose(y, y_ref, atol=2e-2, rtol=2e-2), \
        float(jnp.max(jnp.abs(y - y_ref)))

    # num_mid_layer = 1 (no mid layers) exercises the other kernel arity.
    params1 = init_mlp_params(k_param2, input_size, output_size,
                              mid_size=mid_size, num_mid_layer=1)
    prepared1 = prepare_mlp_params(params1)
    y1 = mlp_forward(prepared1, x, dropout_p=0.1, train=False, seed=0)
    jax.block_until_ready(y1)
    y1_ref = ref_forward(params1, x)
    assert jnp.allclose(y1, y1_ref, atol=2e-2, rtol=2e-2)

    # Train path (dropout active) — make sure it lowers, runs and is finite.
    y_train = mlp_forward(prepared, x, dropout_p=0.1, train=True, seed=123)
    jax.block_until_ready(y_train)
    assert y_train.shape == (batch, seq, output_size)
    assert bool(jnp.all(jnp.isfinite(y_train)))

    print("KERNEL_OK")
</pallas_src>

<mosaic_0001>
module attributes {stable_mosaic.version = 11 : i64} {
  func.func @kernel(%arg0: i32, %arg1: memref<1xi32, #tpu.memory_space<smem>>, %arg2: memref<16x128xbf16, #tpu.memory_space<vmem>>, %arg3: memref<128x128xbf16, #tpu.memory_space<vmem>>, %arg4: memref<1x128xf32, #tpu.memory_space<vmem>>, %arg5: memref<1x128x128xbf16, #tpu.memory_space<vmem>>, %arg6: memref<1x1x128xf32, #tpu.memory_space<vmem>>, %arg7: memref<128x128xbf16, #tpu.memory_space<vmem>>, %arg8: memref<1x128xf32, #tpu.memory_space<vmem>>, %arg9: memref<16x128xf32, #tpu.memory_space<vmem>>) attributes {dimension_semantics = [#tpu.dimension_semantics<parallel>], iteration_bounds = array<i64: 1>, scalar_prefetch = 1 : i64, scratch_operands = 0 : i64, tpu.core_type = #tpu.core_type<tc>, window_params = [{transform_indices = @transform_0, window_bounds = array<i64: 16, 128>}, {pipeline_mode = #tpu.pipeline_mode<synchronous>, transform_indices = @transform_1, window_bounds = array<i64: 128, 128>}, {pipeline_mode = #tpu.pipeline_mode<synchronous>, transform_indices = @transform_2, window_bounds = array<i64: 1, 128>}, {pipeline_mode = #tpu.pipeline_mode<synchronous>, transform_indices = @transform_3, window_bounds = array<i64: 1, 128, 128>}, {pipeline_mode = #tpu.pipeline_mode<synchronous>, transform_indices = @transform_4, window_bounds = array<i64: 1, 1, 128>}, {pipeline_mode = #tpu.pipeline_mode<synchronous>, transform_indices = @transform_5, window_bounds = array<i64: 128, 128>}, {pipeline_mode = #tpu.pipeline_mode<synchronous>, transform_indices = @transform_6, window_bounds = array<i64: 1, 128>}, {transform_indices = @transform_7, window_bounds = array<i64: 16, 128>}]} {
    %c0 = arith.constant 0 : index
    %c0_0 = arith.constant 0 : index
    %0 = vector.load %arg2[%c0, %c0_0] : memref<16x128xbf16, #tpu.memory_space<vmem>>, vector<16x128xbf16>
    %c0_1 = arith.constant 0 : index
    %c0_2 = arith.constant 0 : index
    %1 = vector.load %arg3[%c0_1, %c0_2] : memref<128x128xbf16, #tpu.memory_space<vmem>>, vector<128x128xbf16>
    %cst = arith.constant dense<0.000000e+00> : vector<16x128xf32>
    %2 = tpu.matmul %0, %1, %cst {dimension_numbers = #tpu.dot_dimension_numbers<[1], [0], [0], [1], [0, 0, 1, 1], [], []>} : vector<16x128xbf16>, vector<128x128xbf16>, vector<16x128xf32> -> vector<16x128xf32>
    %c0_3 = arith.constant 0 : index
    %c0_4 = arith.constant 0 : index
    %3 = vector.load %arg4[%c0_3, %c0_4] : memref<1x128xf32, #tpu.memory_space<vmem>>, vector<1x128xf32>
    %4 = vector.broadcast %3 : vector<1x128xf32> to vector<16x128xf32>
    %5 = arith.addf %2, %4 : vector<16x128xf32>
    %cst_5 = arith.constant 0.000000e+00 : f32
    %6 = vector.broadcast %cst_5 : f32 to vector<16x128xf32>
    %7 = arith.maximumf %5, %6 : vector<16x128xf32>
    %8 = arith.truncf %7 : vector<16x128xf32> to vector<16x128xbf16>
    %c0_6 = arith.constant 0 : index
    %c0_7 = arith.constant 0 : index
    %c0_8 = arith.constant 0 : index
    %9 = vector.load %arg5[%c0_6, %c0_7, %c0_8] : memref<1x128x128xbf16, #tpu.memory_space<vmem>>, vector<1x128x128xbf16>
    %10 = vector.shape_cast %9 : vector<1x128x128xbf16> to vector<128x128xbf16>
    %cst_9 = arith.constant dense<0.000000e+00> : vector<16x128xf32>
    %11 = tpu.matmul %8, %10, %cst_9 {dimension_numbers = #tpu.dot_dimension_numbers<[1], [0], [0], [1], [0, 0, 1, 1], [], []>} : vector<16x128xbf16>, vector<128x128xbf16>, vector<16x128xf32> -> vector<16x128xf32>
    %c0_10 = arith.constant 0 : index
    %c0_11 = arith.constant 0 : index
    %c0_12 = arith.constant 0 : index
    %12 = vector.load %arg6[%c0_10, %c0_11, %c0_12] : memref<1x1x128xf32, #tpu.memory_space<vmem>>, vector<1x1x128xf32>
    %13 = vector.shape_cast %12 : vector<1x1x128xf32> to vector<1x128xf32>
    %14 = vector.broadcast %13 : vector<1x128xf32> to vector<16x128xf32>
    %15 = arith.addf %11, %14 : vector<16x128xf32>
    %cst_13 = arith.constant 0.000000e+00 : f32
    %16 = vector.broadcast %cst_13 : f32 to vector<16x128xf32>
    %17 = arith.maximumf %15, %16 : vector<16x128xf32>
    %18 = arith.truncf %17 : vector<16x128xf32> to vector<16x128xbf16>
    %c0_14 = arith.constant 0 : index
    %c0_15 = arith.constant 0 : index
    %19 = vector.load %arg7[%c0_14, %c0_15] : memref<128x128xbf16, #tpu.memory_space<vmem>>, vector<128x128xbf16>
    %cst_16 = arith.constant dense<0.000000e+00> : vector<16x128xf32>
    %20 = tpu.matmul %18, %19, %cst_16 {dimension_numbers = #tpu.dot_dimension_numbers<[1], [0], [0], [1], [0, 0, 1, 1], [], []>} : vector<16x128xbf16>, vector<128x128xbf16>, vector<16x128xf32> -> vector<16x128xf32>
    %c0_17 = arith.constant 0 : index
    %c0_18 = arith.constant 0 : index
    %21 = vector.load %arg8[%c0_17, %c0_18] : memref<1x128xf32, #tpu.memory_space<vmem>>, vector<1x128xf32>
    %22 = vector.broadcast %21 : vector<1x128xf32> to vector<16x128xf32>
    %23 = arith.addf %20, %22 : vector<16x128xf32>
    %c0_19 = arith.constant 0 : index
    %c0_20 = arith.constant 0 : index
    %24 = vector.load %arg9[%c0_19, %c0_20] : memref<16x128xf32, #tpu.memory_space<vmem>>, vector<16x128xf32>
    tpu.vector_store %arg9[%c0_19, %c0_20], %23 {strides = array<i32>} : memref<16x128xf32, #tpu.memory_space<vmem>>, vector<16x128xf32>,
    return
  }
  func.func @transform_0(%arg0: i32, %arg1: memref<1xi32, #tpu.memory_space<smem>>) -> (i32, i32) {
    %c0_i32 = arith.constant 0 : i32
    %c0_i32_0 = arith.constant 0 : i32
    return %arg0, %c0_i32 : i32, i32
  }
  func.func @transform_1(%arg0: i32, %arg1: memref<1xi32, #tpu.memory_space<smem>>) -> (i32, i32) {
    %c0_i32 = arith.constant 0 : i32
    %c0_i32_0 = arith.constant 0 : i32
    %c0_i32_1 = arith.constant 0 : i32
    return %c0_i32, %c0_i32_0 : i32, i32
  }
  func.func @transform_2(%arg0: i32, %arg1: memref<1xi32, #tpu.memory_space<smem>>) -> (i32, i32) {
    %c0_i32 = arith.constant 0 : i32
    %c0_i32_0 = arith.constant 0 : i32
    %c0_i32_1 = arith.constant 0 : i32
    return %c0_i32, %c0_i32_0 : i32, i32
  }
  func.func @transform_3(%arg0: i32, %arg1: memref<1xi32, #tpu.memory_space<smem>>) -> (i32, i32, i32) {
    %c0_i32 = arith.constant 0 : i32
    %c0_i32_0 = arith.constant 0 : i32
    %c0_i32_1 = arith.constant 0 : i32
    %c0_i32_2 = arith.constant 0 : i32
    return %c0_i32, %c0_i32_0, %c0_i32_1 : i32, i32, i32
  }
  func.func @transform_4(%arg0: i32, %arg1: memref<1xi32, #tpu.memory_space<smem>>) -> (i32, i32, i32) {
    %c0_i32 = arith.constant 0 : i32
    %c0_i32_0 = arith.constant 0 : i32
    %c0_i32_1 = arith.constant 0 : i32
    %c0_i32_2 = arith.constant 0 : i32
    return %c0_i32, %c0_i32_0, %c0_i32_1 : i32, i32, i32
  }
  func.func @transform_5(%arg0: i32, %arg1: memref<1xi32, #tpu.memory_space<smem>>) -> (i32, i32) {
    %c0_i32 = arith.constant 0 : i32
    %c0_i32_0 = arith.constant 0 : i32
    %c0_i32_1 = arith.constant 0 : i32
    return %c0_i32, %c0_i32_0 : i32, i32
  }
  func.func @transform_6(%arg0: i32, %arg1: memref<1xi32, #tpu.memory_space<smem>>) -> (i32, i32) {
    %c0_i32 = arith.constant 0 : i32
    %c0_i32_0 = arith.constant 0 : i32
    %c0_i32_1 = arith.constant 0 : i32
    return %c0_i32, %c0_i32_0 : i32, i32
  }
  func.func @transform_7(%arg0: i32, %arg1: memref<1xi32, #tpu.memory_space<smem>>) -> (i32, i32) {
    %c0_i32 = arith.constant 0 : i32
    %c0_i32_0 = arith.constant 0 : i32
    return %arg0, %c0_i32 : i32, i32
  }
}

</mosaic_0001>

<llo_original>
// kernel: tpu_custom_call.1
$region0: #{tpu_custom_call.1}
  #allocation0 [shape = 'u32[]', space=smem, size = 0x4, offset = 0x4, fixed_abs, tag = 'smem constant byte address 0x4 - core index']
  #allocation1 [shape = 'u32[144,128]{1,0:T(1,128)}', space=vmem, size = 0x12000, scoped, tag = 'internal scratch']
  #allocation2 [shape = 's32[1]{0}', space=sflag, size = 0x4, scoped, tag = 'scoped memory for tpu_custom_call.1']
  #allocation3 [shape = 's32[1]{0:T(128)S(6)}', space=smem, size = 0x200, scoped, tag = 'prefetched SMEM operand 0']
  %s0 = inlined_call_operand.<no memory space> [shape: s32[1], index: 0, kind: input, shape index: {}]
  %s1 = inlined_call_operand.hbm [shape: bf16[16,128], index: 1, kind: input, shape index: {}]
  %s2 = inlined_call_operand.hbm [shape: bf16[128,128], index: 2, kind: input, shape index: {}]
  %s3 = inlined_call_operand.vmem [shape: f32[1,128], index: 3, kind: input, shape index: {}]
  %s4 = inlined_call_operand.hbm [shape: bf16[1,128,128], index: 4, kind: input, shape index: {}]
  %s5 = inlined_call_operand.vmem [shape: f32[1,1,128], index: 5, kind: input, shape index: {}]
  %s6 = inlined_call_operand.hbm [shape: bf16[128,128], index: 6, kind: input, shape index: {}]
  %s7 = inlined_call_operand.vmem [shape: f32[1,128], index: 7, kind: input, shape index: {}]
  %s8 = inlined_call_operand.hbm [shape: f32[16,128], index: 8, kind: output, shape index: {}]
  %s9 = sld [smem:[#allocation0]]
  $region54: #{tpu_custom_call.1} parent=0
    _
  %s11 = ssub.s32 1, %s9
  %s12 = scalar_select 0, %s11, %s9
  %13 = sst [smem:[#allocation3]] %s0
  $region1: #{tpu_custom_call.1} parent=0
    #allocation4 [shape = 'u8[4096]{0}', space=vmem, size = 0x1000, scoped, tag = 'input window, operand 1, single buffered']
    #allocation5 [shape = 's32[1]{0}', space=sflag, size = 0x4, scoped, tag = 'scoped memory for tpu_custom_call.1']
    #allocation6 [shape = 's32[1]{0}', space=sflag, size = 0x4, scoped, tag = 'scoped memory for tpu_custom_call.1']
    #allocation7 [shape = 'u8[32768]{0}', space=vmem, size = 0x8000, scoped, tag = 'input window, operand 2, single buffered']
    #allocation8 [shape = 's32[1]{0}', space=sflag, size = 0x4, scoped, tag = 'scoped memory for tpu_custom_call.1']
    #allocation9 [shape = 'u8[32768]{0}', space=vmem, size = 0x8000, scoped, tag = 'input window, operand 4, single buffered']
    #allocation10 [shape = 'u8[32768]{0}', space=vmem, size = 0x8000, scoped, tag = 'input window, operand 6, single buffered']
    #allocation11 [shape = 's32[1]{0}', space=sflag, size = 0x4, scoped, tag = 'scoped memory for tpu_custom_call.1']
    #allocation12 [shape = 'u8[8192]{0}', space=vmem, size = 0x2000, scoped, tag = 'output window, operand 0, single buffered']
    %14 = vsyncpa [#allocation5], 0
    %15 = vsyncpa [#allocation8], 0
    %16 = vsyncpa [#allocation11], 0
    %17 = vsyncpa [#allocation6], 0
    // Predicated region
    $region2: #{tpu_custom_call.1} parent=1 // pred_check
      _
    $region3: #{tpu_custom_call.1} parent=1 // pred_check_branch
      %19 = sbr.rel (0) target = $region5
    $region4: #{tpu_custom_call.1} parent=1 // pred_region
      %s21 = ssub.s32 128, 128
      %22 = vsyncadd [#allocation5], %s21
      %s23 = sshll.u32 [#allocation4], 4
      %s24 = int_to_ptr.vmem [resolvable:$true] %s23
      %29 = dma.hbm_to_vmem [thread:$0]  %s1, 128, %s24, [#allocation5], 64, 64, 4
    $region5: #{tpu_custom_call.1} parent=1 // pred_fallthru
      _
    // Predicated region
    $region6: #{tpu_custom_call.1} parent=1 // pred_check
      _
    $region7: #{tpu_custom_call.1} parent=1 // pred_check_branch
      %31 = sbr.rel (0) target = $region9
    $region8: #{tpu_custom_call.1} parent=1 // pred_region
      %s33 = ssub.s32 1024, 1024
      %34 = vsyncadd [#allocation8], %s33
      %s35 = sshll.u32 [#allocation7], 4
      %s36 = int_to_ptr.vmem [resolvable:$true] %s35
      %41 = dma.hbm_to_vmem [thread:$0]  %s2, 1024, %s36, [#allocation8], 64, 64, 4
    $region9: #{tpu_custom_call.1} parent=1 // pred_fallthru
      _
    // Predicated region
    $region10: #{tpu_custom_call.1} parent=1 // pred_check
      _
    $region11: #{tpu_custom_call.1} parent=1 // pred_check_branch
      %43 = sbr.rel (0) target = $region13
    $region12: #{tpu_custom_call.1} parent=1 // pred_region
      _
    $region13: #{tpu_custom_call.1} parent=1 // pred_fallthru
      _
    // Predicated region
    $region14: #{tpu_custom_call.1} parent=1 // pred_check
      _
    $region15: #{tpu_custom_call.1} parent=1 // pred_check_branch
      %45 = sbr.rel (0) target = $region17
    $region16: #{tpu_custom_call.1} parent=1 // pred_region
      %s47 = ssub.s32 1024, 1024
      %48 = vsyncadd [#allocation8], %s47
      %s49 = sshll.u32 [#allocation9], 4
      %s50 = int_to_ptr.vmem [resolvable:$true] %s49
      %55 = dma.hbm_to_vmem [thread:$0]  %s4, 1024, %s50, [#allocation8], 64, 64, 4
    $region17: #{tpu_custom_call.1} parent=1 // pred_fallthru
      _
    // Predicated region
    $region18: #{tpu_custom_call.1} parent=1 // pred_check
      _
    $region19: #{tpu_custom_call.1} parent=1 // pred_check_branch
      %57 = sbr.rel (0) target = $region21
    $region20: #{tpu_custom_call.1} parent=1 // pred_region
      _
    $region21: #{tpu_custom_call.1} parent=1 // pred_fallthru
      _
    // Predicated region
    $region22: #{tpu_custom_call.1} parent=1 // pred_check
      _
    $region23: #{tpu_custom_call.1} parent=1 // pred_check_branch
      %59 = sbr.rel (0) target = $region25
    $region24: #{tpu_custom_call.1} parent=1 // pred_region
      %s61 = ssub.s32 1024, 1024
      %62 = vsyncadd [#allocation11], %s61
      %s63 = sshll.u32 [#allocation10], 4
      %s64 = int_to_ptr.vmem [resolvable:$true] %s63
      %69 = dma.hbm_to_vmem [thread:$0]  %s6, 1024, %s64, [#allocation11], 64, 64, 4
    $region25: #{tpu_custom_call.1} parent=1 // pred_fallthru
      _
    // Predicated region
    $region26: #{tpu_custom_call.1} parent=1 // pred_check
      _
    $region27: #{tpu_custom_call.1} parent=1 // pred_check_branch
      %71 = sbr.rel (0) target = $region29
    $region28: #{tpu_custom_call.1} parent=1 // pred_region
      _
    $region29: #{tpu_custom_call.1} parent=1 // pred_fallthru
      _
    // Predicated region
    $region30: #{tpu_custom_call.1} parent=1 // pred_check
      _
    $region31: #{tpu_custom_call.1} parent=1 // pred_check_branch
      %73 = sbr.rel (0) target = $region33
    $region32: #{tpu_custom_call.1} parent=1 // pred_region
      %74 = dma.done [#allocation5], 128
    $region33: #{tpu_custom_call.1} parent=1 // pred_fallthru
      _
    // Predicated region
    $region34: #{tpu_custom_call.1} parent=1 // pred_check
      _
    $region35: #{tpu_custom_call.1} parent=1 // pred_check_branch
      %76 = sbr.rel (0) target = $region37
    $region36: #{tpu_custom_call.1} parent=1 // pred_region
      %77 = dma.done [#allocation8], 1024
    $region37: #{tpu_custom_call.1} parent=1 // pred_fallthru
      _
    // Predicated region
    $region38: #{tpu_custom_call.1} parent=1 // pred_check
      _
    $region39: #{tpu_custom_call.1} parent=1 // pred_check_branch
      %79 = sbr.rel (0) target = $region41
    $region40: #{tpu_custom_call.1} parent=1 // pred_region
      %80 = dma.done [#allocation8], 1024
    $region41: #{tpu_custom_call.1} parent=1 // pred_fallthru
      _
    // Predicated region
    $region42: #{tpu_custom_call.1} parent=1 // pred_check
      _
    $region43: #{tpu_custom_call.1} parent=1 // pred_check_branch
      %82 = sbr.rel (0) target = $region45
    $region44: #{tpu_custom_call.1} parent=1 // pred_region
      %83 = dma.done [#allocation11], 1024
    $region45: #{tpu_custom_call.1} parent=1 // pred_fallthru
      _
    %v85 = vld [vmem:[#allocation4] sm:$0xf]
    %v86 = vld [vmem:[#allocation4 + $0x4] sm:$0xf]
    %v87 = vld [vmem:[#allocation7] sm:$0xf]
    %v88 = vld [vmem:[#allocation7 + $0x4] sm:$0xf]
    %v89 = vld [vmem:[#allocation7 + $0x8] sm:$0xf]
    %v90 = vld [vmem:[#allocation7 + $0xc] sm:$0xf]
    %v91 = vld [vmem:[#allocation7 + $0x10] sm:$0xf]
    %v92 = vld [vmem:[#allocation7 + $0x14] sm:$0xf]
    %v93 = vld [vmem:[#allocation7 + $0x18] sm:$0xf]
    %v94 = vld [vmem:[#allocation7 + $0x1c] sm:$0xf]
    %v95 = vld [vmem:[#allocation7 + $0x20] sm:$0xf]
    %v96 = vld [vmem:[#allocation7 + $0x24] sm:$0xf]
    %v97 = vld [vmem:[#allocation7 + $0x28] sm:$0xf]
    %v98 = vld [vmem:[#allocation7 + $0x2c] sm:$0xf]
    %v99 = vld [vmem:[#allocation7 + $0x30] sm:$0xf]
    %v100 = vld [vmem:[#allocation7 + $0x34] sm:$0xf]
    %v101 = vld [vmem:[#allocation7 + $0x38] sm:$0xf]
    %v102 = vld [vmem:[#allocation7 + $0x3c] sm:$0xf]
    %v103 = vld [vmem:[%s3] sm:$0x1]
    %v105 = vlaneseq
    %v106 = vshrl.u32 %v105, 7
    %v107 = vsub.s32 0, %v106
    %v108 = vrot.slane %v103, %v107
    %v112 = vunpack.c.l.b16 %v85
    %v113 = vunpack.c.l.b16 %v86
    %v114 = vpack.c.b16 %v113, %v112
    %v132 = vunpack.c.l.b16 %v87
    %v133 = vunpack.c.l.b16 %v88
    %v134 = vunpack.c.l.b16 %v89
    %v135 = vunpack.c.l.b16 %v90
    %v136 = vunpack.c.l.b16 %v91
    %v137 = vunpack.c.l.b16 %v92
    %v138 = vunpack.c.l.b16 %v93
    %v139 = vunpack.c.l.b16 %v94
    %v140 = vunpack.c.l.b16 %v95
    %v141 = vunpack.c.l.b16 %v96
    %v142 = vunpack.c.l.b16 %v97
    %v143 = vunpack.c.l.b16 %v98
    %v144 = vunpack.c.l.b16 %v99
    %v145 = vunpack.c.l.b16 %v100
    %v146 = vunpack.c.l.b16 %v101
    %v147 = vunpack.c.l.b16 %v102
    %v148 = vpack.c.b16 %v133, %v132
    %v149 = vpack.c.b16 %v135, %v134
    %v150 = vpack.c.b16 %v137, %v136
    %v151 = vpack.c.b16 %v139, %v138
    %v152 = vpack.c.b16 %v141, %v140
    %v153 = vpack.c.b16 %v143, %v142
    %v154 = vpack.c.b16 %v145, %v144
    %v155 = vpack.c.b16 %v147, %v146
    %164 = vmatprep.subr.bf16.mxu0 0
    %165 = vmatpush1.bf16.msra.mxu0 %v148
    %166 = vmatprep.subr.bf16.mxu0 0
    %167 = vmatpush1.bf16.msra.mxu0 %v149
    %168 = vmatprep.subr.bf16.mxu0 0
    %169 = vmatpush1.bf16.msra.mxu0 %v150
    %170 = vmatprep.subr.bf16.mxu0 0
    %171 = vmatpush1.bf16.msra.mxu0 %v151
    %172 = vmatprep.subr.bf16.mxu0 0
    %173 = vmatpush1.bf16.msra.mxu0 %v152
    %174 = vmatprep.subr.bf16.mxu0 0
    %175 = vmatpush1.bf16.msra.mxu0 %v153
    %176 = vmatprep.subr.bf16.mxu0 0
    %177 = vmatpush1.bf16.msra.mxu0 %v154
    %178 = vmatprep.subr.bf16.mxu0 0
    %179 = vmatpush1.bf16.msra.mxu0 %v155
    %180 = vmatprep.subr.bf16.mxu0 0
    %181 = vmatpush1.bf16.msra.mxu0 0
    %182 = vmatprep.subr.bf16.mxu0 0
    %183 = vmatpush1.bf16.msra.mxu0 0
    %184 = vmatprep.subr.bf16.mxu0 0
    %185 = vmatpush1.bf16.msra.mxu0 0
    %186 = vmatprep.subr.bf16.mxu0 0
    %187 = vmatpush1.bf16.msra.mxu0 0
    %188 = vmatprep.subr.bf16.mxu0 0
    %189 = vmatpush1.bf16.msra.mxu0 0
    %190 = vmatprep.subr.bf16.mxu0 0
    %191 = vmatpush1.bf16.msra.mxu0 0
    %192 = vmatprep.subr.bf16.mxu0 0
    %193 = vmatpush1.bf16.msra.mxu0 0
    %194 = vmatprep.subr.bf16.mxu0 0
    %195 = vmatpush1.bf16.msra.mxu0 0
    %196 = vmatprep.mubr.bf16.mxu0 0
    %197 = vmatmul.mubr.bf16.gmra.mrb[0].mxu0 %v114
    %v198 = vpop.f32.mrb[0].mxu0
    %v199 = vadd.f32 %v108, %v198
    %v200 = vpop.f32.mrb[0].mxu0
    %v201 = vpop.f32.mrb[0].mxu0
    %v202 = vadd.f32 %v108, %v201
    %v203 = vpop.f32.mrb[0].mxu0
    %204 = vdwg.mxu0
    %v205 = vmax.f32 %v199, 0.0
    %v206 = vmax.f32 %v202, 0.0
    %v207 = vpack.c.bf16 %v206, %v205
    %v208 = vld [vmem:[#allocation9] sm:$0xf]
    %v209 = vld [vmem:[#allocation9 + $0x4] sm:$0xf]
    %v210 = vld [vmem:[#allocation9 + $0x8] sm:$0xf]
    %v211 = vld [vmem:[#allocation9 + $0xc] sm:$0xf]
    %v212 = vld [vmem:[#allocation9 + $0x10] sm:$0xf]
    %v213 = vld [vmem:[#allocation9 + $0x14] sm:$0xf]
    %v214 = vld [vmem:[#allocation9 + $0x18] sm:$0xf]
    %v215 = vld [vmem:[#allocation9 + $0x1c] sm:$0xf]
    %v216 = vld [vmem:[#allocation9 + $0x20] sm:$0xf]
    %v217 = vld [vmem:[#allocation9 + $0x24] sm:$0xf]
    %v218 = vld [vmem:[#allocation9 + $0x28] sm:$0xf]
    %v219 = vld [vmem:[#allocation9 + $0x2c] sm:$0xf]
    %v220 = vld [vmem:[#allocation9 + $0x30] sm:$0xf]
    %v221 = vld [vmem:[#allocation9 + $0x34] sm:$0xf]
    %v222 = vld [vmem:[#allocation9 + $0x38] sm:$0xf]
    %v223 = vld [vmem:[#allocation9 + $0x3c] sm:$0xf]
    %v224 = vld [vmem:[%s5] sm:$0x1]
    %v226 = vlaneseq
    %v227 = vshrl.u32 %v226, 7
    %v228 = vsub.s32 0, %v227
    %v229 = vrot.slane %v224, %v228
    %v247 = vunpack.c.l.b16 %v208
    %v248 = vunpack.c.l.b16 %v209
    %v249 = vunpack.c.l.b16 %v210
    %v250 = vunpack.c.l.b16 %v211
    %v251 = vunpack.c.l.b16 %v212
    %v252 = vunpack.c.l.b16 %v213
    %v253 = vunpack.c.l.b16 %v214
    %v254 = vunpack.c.l.b16 %v215
    %v255 = vunpack.c.l.b16 %v216
    %v256 = vunpack.c.l.b16 %v217
    %v257 = vunpack.c.l.b16 %v218
    %v258 = vunpack.c.l.b16 %v219
    %v259 = vunpack.c.l.b16 %v220
    %v260 = vunpack.c.l.b16 %v221
    %v261 = vunpack.c.l.b16 %v222
    %v262 = vunpack.c.l.b16 %v223
    %v263 = vpack.c.b16 %v248, %v247
    %v264 = vpack.c.b16 %v250, %v249
    %v265 = vpack.c.b16 %v252, %v251
    %v266 = vpack.c.b16 %v254, %v253
    %v267 = vpack.c.b16 %v256, %v255
    %v268 = vpack.c.b16 %v258, %v257
    %v269 = vpack.c.b16 %v260, %v259
    %v270 = vpack.c.b16 %v262, %v261
    %279 = vmatprep.subr.bf16.mxu0 0
    %280 = vmatpush1.bf16.msra.mxu0 %v263
    %281 = vmatprep.subr.bf16.mxu0 0
    %282 = vmatpush1.bf16.msra.mxu0 %v264
    %283 = vmatprep.subr.bf16.mxu0 0
    %284 = vmatpush1.bf16.msra.mxu0 %v265
    %285 = vmatprep.subr.bf16.mxu0 0
    %286 = vmatpush1.bf16.msra.mxu0 %v266
    %287 = vmatprep.subr.bf16.mxu0 0
    %288 = vmatpush1.bf16.msra.mxu0 %v267
    %289 = vmatprep.subr.bf16.mxu0 0
    %290 = vmatpush1.bf16.msra.mxu0 %v268
    %291 = vmatprep.subr.bf16.mxu0 0
    %292 = vmatpush1.bf16.msra.mxu0 %v269
    %293 = vmatprep.subr.bf16.mxu0 0
    %294 = vmatpush1.bf16.msra.mxu0 %v270
    %295 = vmatprep.subr.bf16.mxu0 0
    %296 = vmatpush1.bf16.msra.mxu0 0
    %297 = vmatprep.subr.bf16.mxu0 0
    %298 = vmatpush1.bf16.msra.mxu0 0
    %299 = vmatprep.subr.bf16.mxu0 0
    %300 = vmatpush1.bf16.msra.mxu0 0
    %301 = vmatprep.subr.bf16.mxu0 0
    %302 = vmatpush1.bf16.msra.mxu0 0
    %303 = vmatprep.subr.bf16.mxu0 0
    %304 = vmatpush1.bf16.msra.mxu0 0
    %305 = vmatprep.subr.bf16.mxu0 0
    %306 = vmatpush1.bf16.msra.mxu0 0
    %307 = vmatprep.subr.bf16.mxu0 0
    %308 = vmatpush1.bf16.msra.mxu0 0
    %309 = vmatprep.subr.bf16.mxu0 0
    %310 = vmatpush1.bf16.msra.mxu0 0
    %311 = vmatprep.mubr.bf16.mxu0 0
    %312 = vmatmul.mubr.bf16.gmra.mrb[0].mxu0 %v207
    %v313 = vpop.f32.mrb[0].mxu0
    %v314 = vadd.f32 %v229, %v313
    %v315 = vpop.f32.mrb[0].mxu0
    %v316 = vpop.f32.mrb[0].mxu0
    %v317 = vadd.f32 %v229, %v316
    %v318 = vpop.f32.mrb[0].mxu0
    %319 = vdwg.mxu0
    %v320 = vmax.f32 %v314, 0.0
    %v321 = vmax.f32 %v317, 0.0
    %v322 = vpack.c.bf16 %v321, %v320
    %v323 = vld [vmem:[#allocation10] sm:$0xf]
    %v324 = vld [vmem:[#allocation10 + $0x4] sm:$0xf]
    %v325 = vld [vmem:[#allocation10 + $0x8] sm:$0xf]
    %v326 = vld [vmem:[#allocation10 + $0xc] sm:$0xf]
    %v327 = vld [vmem:[#allocation10 + $0x10] sm:$0xf]
    %v328 = vld [vmem:[#allocation10 + $0x14] sm:$0xf]
    %v329 = vld [vmem:[#allocation10 + $0x18] sm:$0xf]
    %v330 = vld [vmem:[#allocation10 + $0x1c] sm:$0xf]
    %v331 = vld [vmem:[#allocation10 + $0x20] sm:$0xf]
    %v332 = vld [vmem:[#allocation10 + $0x24] sm:$0xf]
    %v333 = vld [vmem:[#allocation10 + $0x28] sm:$0xf]
    %v334 = vld [vmem:[#allocation10 + $0x2c] sm:$0xf]
    %v335 = vld [vmem:[#allocation10 + $0x30] sm:$0xf]
    %v336 = vld [vmem:[#allocation10 + $0x34] sm:$0xf]
    %v337 = vld [vmem:[#allocation10 + $0x38] sm:$0xf]
    %v338 = vld [vmem:[#allocation10 + $0x3c] sm:$0xf]
    %v339 = vld [vmem:[%s7] sm:$0x1]
    %v341 = vlaneseq
    %v342 = vshrl.u32 %v341, 7
    %v343 = vsub.s32 0, %v342
    %v344 = vrot.slane %v339, %v343
    %v362 = vunpack.c.l.b16 %v323
    %v363 = vunpack.c.l.b16 %v324
    %v364 = vunpack.c.l.b16 %v325
    %v365 = vunpack.c.l.b16 %v326
    %v366 = vunpack.c.l.b16 %v327
    %v367 = vunpack.c.l.b16 %v328
    %v368 = vunpack.c.l.b16 %v329
    %v369 = vunpack.c.l.b16 %v330
    %v370 = vunpack.c.l.b16 %v331
    %v371 = vunpack.c.l.b16 %v332
    %v372 = vunpack.c.l.b16 %v333
    %v373 = vunpack.c.l.b16 %v334
    %v374 = vunpack.c.l.b16 %v335
    %v375 = vunpack.c.l.b16 %v336
    %v376 = vunpack.c.l.b16 %v337
    %v377 = vunpack.c.l.b16 %v338
    %v378 = vpack.c.b16 %v363, %v362
    %v379 = vpack.c.b16 %v365, %v364
    %v380 = vpack.c.b16 %v367, %v366
    %v381 = vpack.c.b16 %v369, %v368
    %v382 = vpack.c.b16 %v371, %v370
    %v383 = vpack.c.b16 %v373, %v372
    %v384 = vpack.c.b16 %v375, %v374
    %v385 = vpack.c.b16 %v377, %v376
    %394 = vmatprep.subr.bf16.mxu0 0
    %395 = vmatpush1.bf16.msra.mxu0 %v378
    %396 = vmatprep.subr.bf16.mxu0 0
    %397 = vmatpush1.bf16.msra.mxu0 %v379
    %398 = vmatprep.subr.bf16.mxu0 0
    %399 = vmatpush1.bf16.msra.mxu0 %v380
    %400 = vmatprep.subr.bf16.mxu0 0
    %401 = vmatpush1.bf16.msra.mxu0 %v381
    %402 = vmatprep.subr.bf16.mxu0 0
    %403 = vmatpush1.bf16.msra.mxu0 %v382
    %404 = vmatprep.subr.bf16.mxu0 0
    %405 = vmatpush1.bf16.msra.mxu0 %v383
    %406 = vmatprep.subr.bf16.mxu0 0
    %407 = vmatpush1.bf16.msra.mxu0 %v384
    %408 = vmatprep.subr.bf16.mxu0 0
    %409 = vmatpush1.bf16.msra.mxu0 %v385
    %410 = vmatprep.subr.bf16.mxu0 0
    %411 = vmatpush1.bf16.msra.mxu0 0
    %412 = vmatprep.subr.bf16.mxu0 0
    %413 = vmatpush1.bf16.msra.mxu0 0
    %414 = vmatprep.subr.bf16.mxu0 0
    %415 = vmatpush1.bf16.msra.mxu0 0
    %416 = vmatprep.subr.bf16.mxu0 0
    %417 = vmatpush1.bf16.msra.mxu0 0
    %418 = vmatprep.subr.bf16.mxu0 0
    %419 = vmatpush1.bf16.msra.mxu0 0
    %420 = vmatprep.subr.bf16.mxu0 0
    %421 = vmatpush1.bf16.msra.mxu0 0
    %422 = vmatprep.subr.bf16.mxu0 0
    %423 = vmatpush1.bf16.msra.mxu0 0
    %424 = vmatprep.subr.bf16.mxu0 0
    %425 = vmatpush1.bf16.msra.mxu0 0
    %426 = vmatprep.mubr.bf16.mxu0 0
    %427 = vmatmul.mubr.bf16.gmra.mrb[0].mxu0 %v322
    %v428 = vpop.f32.mrb[0].mxu0
    %v429 = vadd.f32 %v344, %v428
    %v430 = vpop.f32.mrb[0].mxu0
    %v431 = vpop.f32.mrb[0].mxu0
    %v432 = vadd.f32 %v344, %v431
    %v433 = vpop.f32.mrb[0].mxu0
    %434 = vdwg.mxu0
    %435 = vst [vmem:[#allocation12] sm:$0xff] %v429
    %436 = vst [vmem:[#allocation12 + $0x8] sm:$0xff] %v432
    // Predicated region
    $region46: #{tpu_custom_call.1} parent=1 // pred_check
      _
    $region47: #{tpu_custom_call.1} parent=1 // pred_check_branch
      %438 = sbr.rel (0) target = $region49
    $region48: #{tpu_custom_call.1} parent=1 // pred_region
      %s440 = ssub.s32 256, 256
      %441 = vsyncadd [#allocation6], %s440
      %s442 = sshll.u32 [#allocation12], 4
      %s443 = int_to_ptr.vmem [resolvable:$true] %s442
      %448 = dma.vmem_to_hbm [thread:$0]  %s443, 256, %s8, [#allocation6], 128, 128, 8
    $region49: #{tpu_custom_call.1} parent=1 // pred_fallthru
      _
    // Predicated region
    $region50: #{tpu_custom_call.1} parent=1 // pred_check
      _
    $region51: #{tpu_custom_call.1} parent=1 // pred_check_branch
      %450 = sbr.rel (0) target = $region53
    $region52: #{tpu_custom_call.1} parent=1 // pred_region
      %451 = dma.done [#allocation6], 256
    $region53: #{tpu_custom_call.1} parent=1 // pred_fallthru
      _
    %452 = vsyncpa [#allocation5], 1
    %453 = vsyncpa [#allocation8], 1
    %454 = vsyncpa [#allocation11], 1
    %455 = vsyncpa [#allocation6], 1

</llo_original>
